<compile_context>
chip_gen: v7x
topology: tpu7x:2x2x1
jax: 0.10.0
libtpu: 0.0.40
codegen_flags: <defaults>
</compile_context>

<pallas_src>
import functools
import math

import jax
import jax.numpy as jnp
from jax.experimental import pallas as pl
from jax.experimental.pallas import tpu as pltpu


def _round_up(a, b):
    return -(-a // b) * b


_MAX_UNROLL_U = 256        # largest U handled by the fully-unrolled slice kernel
_SINGLE_STEP_MAX_L = 512   # single-dot matmul variant when padded L fits one tile
_TL = 512                  # contraction tile of the multi-step matmul variant


def _vmem_budget_bytes():
    """Generation-aware VMEM budget (v5e/v6e: 128 MiB, v7x: 64 MiB physical)."""
    cap = 64 * 1024 * 1024
    try:
        info = pltpu.get_tpu_info()
        cap = int(getattr(info, "vmem_capacity_bytes", cap)) or cap
    except Exception:
        pass
    budget = (cap * 3) // 4                      # headroom for Mosaic scratch
    return max(32 * 1024 * 1024, min(budget, 100 * 1024 * 1024))


# ----------------------------------------------------------------------------
# Mode-dependent static parameters (pure Python ints, mirrors the torch logic)
# ----------------------------------------------------------------------------
def _mode_params(L, start, end, stride, dilation, offset, mode):
    ns = offset + start * dilation                       # natural_start
    if mode in ("pad", "replicate"):
        U = (L - 1 + stride) // stride                   # update_shape
        base = ns
    elif mode == "native":
        min_sn = math.ceil(max(-ns, 0) / stride)         # min_stridenum
        kernel_length = (end - start) * dilation + 1
        natural_end = ns + L - 1
        end_by = L - kernel_length
        true_end = min(natural_end, end_by)
        max_sn = (true_end - ns) // stride + 1           # max_stridenum
        U = max(max_sn - min_sn, 0)
        base = ns + min_sn * stride                      # working offset
    else:
        raise ValueError(f"bad mode {mode!r}")
    return U, base


# ----------------------------------------------------------------------------
# Copy path (dilation == 1, any stride): each output position u reads a
# contiguous K-span of the input, written straight into the final flattened
# (u*K + k) column order -> no post-kernel transpose, single write per element.
# ----------------------------------------------------------------------------
def _local_slice_kernel(x_ref, o_ref, *, L, U, K, base, stride, mode):
    """x_ref: (T, L); o_ref: (T, U*K), o[r, u*K + k] = x[r, base + u*stride + k].
    Only pad margins are zero-filled; 'replicate' wraps with <=2 extra copies."""
    T = o_ref.shape[0]
    for u in range(U):                           # U is static & small: unrolled
        s = base + u * stride                    # python int
        col = u * K
        if mode == "replicate":                  # circular wrap over length L
            rem, pos, off = K, s % L, 0
            while rem > 0:
                w = min(rem, L - pos)
                o_ref[:, col + off:col + off + w] = x_ref[:, pos:pos + w]
                pos, off, rem = 0, off + w, rem - w
        else:                                    # 'pad' / 'native': one valid span
            lo = min(max(0, -s), K)
            hi = max(min(K, L - s), lo)
            if lo > 0:                           # left pad margin only
                o_ref[:, col:col + lo] = jnp.zeros((T, lo), o_ref.dtype)
            if hi > lo:
                o_ref[:, col + lo:col + hi] = x_ref[:, s + lo:s + hi]
            if hi < K:                           # right pad margin only
                o_ref[:, col + hi:col + K] = jnp.zeros((T, K - hi), o_ref.dtype)


def _local_slice_path(x2, B, C, L, U, K, N, base, stride, mode, vmem_budget):
    BC = B * C
    dtype = x2.dtype
    itemsize = jnp.dtype(dtype).itemsize
    gran = max(8, 32 // itemsize)                # sublane granularity

    # Row tile from the real double-buffered footprint (input + output blocks);
    # large on v5e/v6e's 128 MiB VMEM, automatically smaller on v7x's 64 MiB.
    per_row = 2 * (L + N) * itemsize
    tile = (int(vmem_budget * 0.6) // max(per_row, 1)) // gran * gran
    tile = max(gran, min(tile, 512, _round_up(BC, gran)))
    if _round_up(BC, tile) // tile < 2 and BC > gran:
        tile = max(gran, _round_up(-(-BC // 2), gran))   # >=2 steps for megacore
    BC_pad = _round_up(BC, tile)

    xp = x2 if BC_pad == BC else jnp.pad(x2, ((0, BC_pad - BC), (0, 0)))

    kernel = functools.partial(_local_slice_kernel, L=L, U=U, K=K,
                               base=base, stride=stride, mode=mode)
    out = pl.pallas_call(
        kernel,
        out_shape=jax.ShapeDtypeStruct((BC_pad, N), dtype),
        grid_spec=pltpu.PrefetchScalarGridSpec(
            num_scalar_prefetch=0,
            grid=(BC_pad // tile,),
            in_specs=[pl.BlockSpec((tile, L), lambda i: (i, 0))],
            out_specs=pl.BlockSpec((tile, N), lambda i: (i, 0)),
        ),
        compiler_params=pltpu.CompilerParams(
            dimension_semantics=("parallel",),
            vmem_limit_bytes=vmem_budget),
        cost_estimate=pl.CostEstimate(
            flops=0, transcendentals=0,
            bytes_accessed=(BC_pad * L + BC_pad * N) * itemsize),
    )(xp)
    out = out if BC_pad == BC else out[:BC]
    return out.reshape(B, C, U, K)               # free: columns already u*K + k


# ----------------------------------------------------------------------------
# General path (dilation > 1 or very large U): gather as one-hot matmul on the
# MXU.  The selection matrix is static, built once, columns in final order.
# ----------------------------------------------------------------------------
def _select_single_kernel(x_ref, sel_ref, o_ref):
    # Whole contraction in one dot: no accumulator scratch, no zero-init.
    o_ref[...] = jnp.dot(x_ref[...], sel_ref[...],
                         preferred_element_type=jnp.float32).astype(o_ref.dtype)


def _select_multi_kernel(x_ref, sel_ref, o_ref, acc_ref, *, tl):
    # sel_ref holds the full (L_pad, tn) selection slab, VMEM-resident across
    # row blocks; only x is streamed over the contraction grid axis.
    l = pl.program_id(2)

    @pl.when(l == 0)
    def _():
        acc_ref[...] = jnp.zeros_like(acc_ref)

    off = pl.multiple_of(l * tl, tl)
    acc_ref[...] += jnp.dot(x_ref[...], sel_ref[pl.ds(off, tl), :],
                            preferred_element_type=jnp.float32)

    @pl.when(l == pl.num_programs(2) - 1)
    def _():
        o_ref[...] = acc_ref[...].astype(o_ref.dtype)


def _local_matmul_path(x2, B, C, L, U, K, N, base, stride, dilation, mode,
                       vmem_budget):
    BC = B * C
    orig_dtype = x2.dtype
    # v7x's MXU has no integer path: do the (exact, one-hot) selection in f32.
    compute_dtype = orig_dtype if jnp.issubdtype(orig_dtype, jnp.floating) \
        else jnp.float32
    xc = x2.astype(compute_dtype)
    itemsize = jnp.dtype(compute_dtype).itemsize
    gran = max(8, 32 // itemsize)

    single = _round_up(L, 128) <= _SINGLE_STEP_MAX_L
    L_pad = _round_up(L, 128) if single else _round_up(L, _TL)
    tn = min(512, _round_up(N, 128))
    if not single:
        # resident selection block (L_pad, tn): keep within ~45% of the budget
        max_tn = (int(vmem_budget * 0.45) // (2 * L_pad * itemsize)) // 128 * 128
        tn = max(128, min(tn, max_tn))
    N_pad = _round_up(N, tn)

    # Static one-hot selection matrix, columns in final (u*K + k) order so the
    # kernel output IS the flattened (U, K) layout (no transpose afterwards).
    # Out-of-range taps are masked explicitly (no reliance on x's zero padding).
    l_ids = jnp.arange(L_pad, dtype=jnp.int32)[:, None]
    m_ids = jnp.arange(N_pad, dtype=jnp.int32)[None, :]
    u_ids = m_ids // K
    k_ids = m_ids % K
    idx = base + u_ids * stride + k_ids * dilation
    if mode == "replicate":
        idx = jnp.mod(idx, L)
        valid = m_ids < N
    else:
        valid = (m_ids < N) & (idx >= 0) & (idx < L)
    sel = jnp.logical_and(l_ids == idx, valid).astype(compute_dtype)

    # Row tile: 256 fills the 256-wide MXU on v6e/v7x (harmless on v5e's 128x128
    # MXU); shrink until the double-buffered footprint fits the VMEM budget.
    tl = L_pad if single else _TL
    tile = min(256, _round_up(BC, gran))

    def footprint(t):
        f = 2 * t * tl * itemsize                 # x blocks (double-buffered)
        f += 2 * L_pad * tn * itemsize            # selection block(s)
        f += 2 * t * tn * itemsize                # output blocks
        if not single:
            f += t * tn * 4                       # f32 accumulator
        return f

    while tile > gran and footprint(tile) > int(vmem_budget * 0.8):
        tile = max(gran, tile // 2 // gran * gran)
    BC_pad = _round_up(BC, tile)
    num_i, num_j = BC_pad // tile, N_pad // tn
    if num_i * num_j < 2 and BC > gran:           # keep both v7x cores busy
        tile = max(gran, _round_up(-(-BC // 2), gran))
        BC_pad = _round_up(BC, tile)
        num_i = BC_pad // tile

    xp = jnp.pad(xc, ((0, BC_pad - BC), (0, L_pad - L)))

    if single:
        # Choose grid order so the *smaller* operand is the one re-streamed.
        restream_sel = num_i * L_pad * N_pad
        restream_x = num_j * BC_pad * L_pad
        if restream_sel <= restream_x:
            grid = (num_i, num_j)
            x_map = lambda i, j: (i, 0)
            s_map = lambda i, j: (0, j)
            o_map = lambda i, j: (i, j)
            bytes_accessed = (BC_pad * L_pad + restream_sel
                              + BC_pad * N_pad) * itemsize
        else:
            grid = (num_j, num_i)
            x_map = lambda j, i: (i, 0)
            s_map = lambda j, i: (0, j)
            o_map = lambda j, i: (i, j)
            bytes_accessed = (restream_x + L_pad * N_pad
                              + BC_pad * N_pad) * itemsize
        out = pl.pallas_call(
            _select_single_kernel,
            out_shape=jax.ShapeDtypeStruct((BC_pad, N_pad), compute_dtype),
            grid_spec=pltpu.PrefetchScalarGridSpec(
                num_scalar_prefetch=0, grid=grid,
                in_specs=[pl.BlockSpec((tile, L_pad), x_map),
                          pl.BlockSpec((L_pad, tn), s_map)],
                out_specs=pl.BlockSpec((tile, tn), o_map)),
            compiler_params=pltpu.CompilerParams(
                dimension_semantics=("parallel", "parallel"),
                vmem_limit_bytes=vmem_budget),
            cost_estimate=pl.CostEstimate(
                flops=2 * BC_pad * L_pad * N_pad, transcendentals=0,
                bytes_accessed=bytes_accessed),
        )(xp, sel)
    else:
        num_l = L_pad // _TL
        out = pl.pallas_call(
            functools.partial(_select_multi_kernel, tl=_TL),
            out_shape=jax.ShapeDtypeStruct((BC_pad, N_pad), compute_dtype),
            grid_spec=pltpu.PrefetchScalarGridSpec(
                num_scalar_prefetch=0,
                grid=(num_j, num_i, num_l),
                in_specs=[pl.BlockSpec((tile, _TL), lambda j, i, l: (i, l)),
                          pl.BlockSpec((L_pad, tn), lambda j, i, l: (0, j))],
                out_specs=pl.BlockSpec((tile, tn), lambda j, i, l: (i, j)),
                scratch_shapes=[pltpu.VMEM((tile, tn), jnp.float32)]),
            compiler_params=pltpu.CompilerParams(
                dimension_semantics=("parallel", "parallel", "arbitrary"),
                vmem_limit_bytes=vmem_budget),
            cost_estimate=pl.CostEstimate(
                flops=2 * BC_pad * L_pad * N_pad, transcendentals=0,
                bytes_accessed=(num_j * BC_pad * L_pad + L_pad * N_pad
                                + BC_pad * N_pad) * itemsize),
        )(xp, sel)

    out = out[:BC, :N].astype(orig_dtype)
    return out.reshape(B, C, U, K)               # free: columns already u*K + k


# ----------------------------------------------------------------------------
# Wrapper (the Local.forward equivalent for rank-1 trailing-dim sampling)
# ----------------------------------------------------------------------------
def local_forward(x, start, end, stride, dilation, offset, mode="pad"):
    assert start <= end, "start nodes must not exceed end nodes"
    assert stride >= 1 and dilation >= 1, "stride / dilation must be positive"
    if mode not in ("pad", "native", "replicate"):
        raise ValueError(f"bad mode {mode!r}")
    B, C, L = x.shape
    K = end - start + 1
    U, base = _mode_params(L, start, end, stride, dilation, offset, mode)
    if U <= 0 or K <= 0:
        return jnp.zeros((B, C, max(U, 0), max(K, 0)), x.dtype)

    BC = B * C
    N = U * K
    x2 = x.reshape(BC, L)
    vmem_budget = _vmem_budget_bytes()

    if dilation == 1 and U <= _MAX_UNROLL_U:
        return _local_slice_path(x2, B, C, L, U, K, N, base, stride, mode,
                                 vmem_budget)
    return _local_matmul_path(x2, B, C, L, U, K, N, base, stride, dilation,
                              mode, vmem_budget)


class Local:
    """Thin stateless equivalent of the torch Local module (rank-1 params)."""

    def __init__(self, start, end, stride, dilation, offset, mode="pad"):
        self.params = (start, end, stride, dilation, offset)
        self.mode = mode

    def __call__(self, x):
        s, e, st, dil, off = self.params
        return local_forward(x, s, e, st, dil, off, mode=self.mode)


# ----------------------------------------------------------------------------
# Pure-JAX reference (matches the torch as_strided semantics)
# ----------------------------------------------------------------------------
def _reference(x, start, end, stride, dilation, offset, mode):
    B, C, L = x.shape
    K = end - start + 1
    U, base = _mode_params(L, start, end, stride, dilation, offset, mode)
    if U <= 0 or K <= 0:
        return jnp.zeros((B, C, max(U, 0), max(K, 0)), x.dtype)
    u = jnp.arange(U)[:, None]
    k = jnp.arange(K)[None, :]
    idx = base + u * stride + k * dilation
    if mode == "replicate":
        idx = jnp.mod(idx, L)
        valid = jnp.ones_like(idx, dtype=bool)
    else:
        valid = (idx >= 0) & (idx < L)
    idxc = jnp.clip(idx, 0, L - 1)
    gathered = x[:, :, idxc]                             # (B, C, U, K)
    return jnp.where(valid[None, None], gathered, jnp.zeros((), x.dtype))


# ----------------------------------------------------------------------------
if __name__ == "__main__":
    x = jax.random.normal(jax.random.PRNGKey(0), (2, 4, 16), dtype=jnp.float32)
    x_odd = jax.random.normal(jax.random.PRNGKey(1), (3, 5, 16), dtype=jnp.float32)
    x_long = jax.random.normal(jax.random.PRNGKey(2), (2, 4, 1024), dtype=jnp.float32)

    configs = [
        # (start, end, stride, dilation, offset)
        (-1, 1, 1, 1, 0),   # stride=1, dilation=1 -> direct-layout slice path
        (-2, 1, 2, 1, 1),   # strided, dilation=1  -> slice path (strided sampling)
        (-2, 2, 2, 2, 1),   # dilated              -> single-step one-hot matmul
    ]

    def check(xi, cfg, mode):
        s, e, st, dil, off = cfg
        out = jax.block_until_ready(
            local_forward(xi, s, e, st, dil, off, mode=mode))
        ref = _reference(xi, s, e, st, dil, off, mode)
        assert out.shape == ref.shape, (cfg, mode, out.shape, ref.shape)
        assert jnp.allclose(out, ref, atol=1e-5), (cfg, mode)

    for cfg in configs:
        for mode in ("pad", "native", "replicate"):
            check(x, cfg, mode)

    # Ragged row count (BC = 15): exercises row padding / megacore splitting.
    check(x_odd, configs[0], "pad")
    check(x_odd, configs[2], "pad")

    # Long sequence: exercises the multi-step (tiled-contraction) matmul kernel
    # with the VMEM-resident selection slab.
    for mode in ("pad", "replicate"):
        check(x_long, (-1, 1, 3, 2, 0), mode)

    print("KERNEL_OK")
</pallas_src>

<mosaic_0001>
module attributes {stable_mosaic.version = 11 : i64} {
  func.func @_local_slice_kernel(%arg0: i32, %arg1: memref<8x16xf32, #tpu.memory_space<vmem>>, %arg2: memref<8x48xf32, #tpu.memory_space<vmem>>) attributes {dimension_semantics = [#tpu.dimension_semantics<parallel>], iteration_bounds = array<i64: 1>, scalar_prefetch = 0 : i64, scratch_operands = 0 : i64, tpu.core_type = #tpu.core_type<tc>, window_params = [{transform_indices = @transform_0, window_bounds = array<i64: 8, 16>}, {transform_indices = @transform_1, window_bounds = array<i64: 8, 48>}]} {
    %cst = arith.constant 0.000000e+00 : f32
    %0 = vector.broadcast %cst : f32 to vector<8x1xf32>
    %c0 = arith.constant 0 : index
    %c0_0 = arith.constant 0 : index
    %1 = vector.load %arg2[%c0, %c0_0] : memref<8x48xf32, #tpu.memory_space<vmem>>, vector<8x1xf32>
    tpu.vector_store %arg2[%c0, %c0_0], %0 {strides = array<i32>} : memref<8x48xf32, #tpu.memory_space<vmem>>, vector<8x1xf32>,
    %c0_1 = arith.constant 0 : index
    %c0_2 = arith.constant 0 : index
    %2 = vector.load %arg1[%c0_1, %c0_2] : memref<8x16xf32, #tpu.memory_space<vmem>>, vector<8x2xf32>
    %c0_3 = arith.constant 0 : index
    %c1 = arith.constant 1 : index
    %3 = vector.load %arg2[%c0_3, %c1] : memref<8x48xf32, #tpu.memory_space<vmem>>, vector<8x2xf32>
    tpu.vector_store %arg2[%c0_3, %c1], %2 {strides = array<i32>} : memref<8x48xf32, #tpu.memory_space<vmem>>, vector<8x2xf32>,
    %c0_4 = arith.constant 0 : index
    %c0_5 = arith.constant 0 : index
    %4 = vector.load %arg1[%c0_4, %c0_5] : memref<8x16xf32, #tpu.memory_space<vmem>>, vector<8x3xf32>
    %c0_6 = arith.constant 0 : index
    %c3 = arith.constant 3 : index
    %5 = vector.load %arg2[%c0_6, %c3] : memref<8x48xf32, #tpu.memory_space<vmem>>, vector<8x3xf32>
    tpu.vector_store %arg2[%c0_6, %c3], %4 {strides = array<i32>} : memref<8x48xf32, #tpu.memory_space<vmem>>, vector<8x3xf32>,
    %c0_7 = arith.constant 0 : index
    %c1_8 = arith.constant 1 : index
    %6 = vector.load %arg1[%c0_7, %c1_8] : memref<8x16xf32, #tpu.memory_space<vmem>>, vector<8x3xf32>
    %c0_9 = arith.constant 0 : index
    %c6 = arith.constant 6 : index
    %7 = vector.load %arg2[%c0_9, %c6] : memref<8x48xf32, #tpu.memory_space<vmem>>, vector<8x3xf32>
    tpu.vector_store %arg2[%c0_9, %c6], %6 {strides = array<i32>} : memref<8x48xf32, #tpu.memory_space<vmem>>, vector<8x3xf32>,
    %c0_10 = arith.constant 0 : index
    %c2 = arith.constant 2 : index
    %8 = vector.load %arg1[%c0_10, %c2] : memref<8x16xf32, #tpu.memory_space<vmem>>, vector<8x3xf32>
    %c0_11 = arith.constant 0 : index
    %c9 = arith.constant 9 : index
    %9 = vector.load %arg2[%c0_11, %c9] : memref<8x48xf32, #tpu.memory_space<vmem>>, vector<8x3xf32>
    tpu.vector_store %arg2[%c0_11, %c9], %8 {strides = array<i32>} : memref<8x48xf32, #tpu.memory_space<vmem>>, vector<8x3xf32>,
    %c0_12 = arith.constant 0 : index
    %c3_13 = arith.constant 3 : index
    %10 = vector.load %arg1[%c0_12, %c3_13] : memref<8x16xf32, #tpu.memory_space<vmem>>, vector<8x3xf32>
    %c0_14 = arith.constant 0 : index
    %c12 = arith.constant 12 : index
    %11 = vector.load %arg2[%c0_14, %c12] : memref<8x48xf32, #tpu.memory_space<vmem>>, vector<8x3xf32>
    tpu.vector_store %arg2[%c0_14, %c12], %10 {strides = array<i32>} : memref<8x48xf32, #tpu.memory_space<vmem>>, vector<8x3xf32>,
    %c0_15 = arith.constant 0 : index
    %c4 = arith.constant 4 : index
    %12 = vector.load %arg1[%c0_15, %c4] : memref<8x16xf32, #tpu.memory_space<vmem>>, vector<8x3xf32>
    %c0_16 = arith.constant 0 : index
    %c15 = arith.constant 15 : index
    %13 = vector.load %arg2[%c0_16, %c15] : memref<8x48xf32, #tpu.memory_space<vmem>>, vector<8x3xf32>
    tpu.vector_store %arg2[%c0_16, %c15], %12 {strides = array<i32>} : memref<8x48xf32, #tpu.memory_space<vmem>>, vector<8x3xf32>,
    %c0_17 = arith.constant 0 : index
    %c5 = arith.constant 5 : index
    %14 = vector.load %arg1[%c0_17, %c5] : memref<8x16xf32, #tpu.memory_space<vmem>>, vector<8x3xf32>
    %c0_18 = arith.constant 0 : index
    %c18 = arith.constant 18 : index
    %15 = vector.load %arg2[%c0_18, %c18] : memref<8x48xf32, #tpu.memory_space<vmem>>, vector<8x3xf32>
    tpu.vector_store %arg2[%c0_18, %c18], %14 {strides = array<i32>} : memref<8x48xf32, #tpu.memory_space<vmem>>, vector<8x3xf32>,
    %c0_19 = arith.constant 0 : index
    %c6_20 = arith.constant 6 : index
    %16 = vector.load %arg1[%c0_19, %c6_20] : memref<8x16xf32, #tpu.memory_space<vmem>>, vector<8x3xf32>
    %c0_21 = arith.constant 0 : index
    %c21 = arith.constant 21 : index
    %17 = vector.load %arg2[%c0_21, %c21] : memref<8x48xf32, #tpu.memory_space<vmem>>, vector<8x3xf32>
    tpu.vector_store %arg2[%c0_21, %c21], %16 {strides = array<i32>} : memref<8x48xf32, #tpu.memory_space<vmem>>, vector<8x3xf32>,
    %c0_22 = arith.constant 0 : index
    %c7 = arith.constant 7 : index
    %18 = vector.load %arg1[%c0_22, %c7] : memref<8x16xf32, #tpu.memory_space<vmem>>, vector<8x3xf32>
    %c0_23 = arith.constant 0 : index
    %c24 = arith.constant 24 : index
    %19 = vector.load %arg2[%c0_23, %c24] : memref<8x48xf32, #tpu.memory_space<vmem>>, vector<8x3xf32>
    tpu.vector_store %arg2[%c0_23, %c24], %18 {strides = array<i32>} : memref<8x48xf32, #tpu.memory_space<vmem>>, vector<8x3xf32>,
    %c0_24 = arith.constant 0 : index
    %c8 = arith.constant 8 : index
    %20 = vector.load %arg1[%c0_24, %c8] : memref<8x16xf32, #tpu.memory_space<vmem>>, vector<8x3xf32>
    %c0_25 = arith.constant 0 : index
    %c27 = arith.constant 27 : index
    %21 = vector.load %arg2[%c0_25, %c27] : memref<8x48xf32, #tpu.memory_space<vmem>>, vector<8x3xf32>
    tpu.vector_store %arg2[%c0_25, %c27], %20 {strides = array<i32>} : memref<8x48xf32, #tpu.memory_space<vmem>>, vector<8x3xf32>,
    %c0_26 = arith.constant 0 : index
    %c9_27 = arith.constant 9 : index
    %22 = vector.load %arg1[%c0_26, %c9_27] : memref<8x16xf32, #tpu.memory_space<vmem>>, vector<8x3xf32>
    %c0_28 = arith.constant 0 : index
    %c30 = arith.constant 30 : index
    %23 = vector.load %arg2[%c0_28, %c30] : memref<8x48xf32, #tpu.memory_space<vmem>>, vector<8x3xf32>
    tpu.vector_store %arg2[%c0_28, %c30], %22 {strides = array<i32>} : memref<8x48xf32, #tpu.memory_space<vmem>>, vector<8x3xf32>,
    %c0_29 = arith.constant 0 : index
    %c10 = arith.constant 10 : index
    %24 = vector.load %arg1[%c0_29, %c10] : memref<8x16xf32, #tpu.memory_space<vmem>>, vector<8x3xf32>
    %c0_30 = arith.constant 0 : index
    %c33 = arith.constant 33 : index
    %25 = vector.load %arg2[%c0_30, %c33] : memref<8x48xf32, #tpu.memory_space<vmem>>, vector<8x3xf32>
    tpu.vector_store %arg2[%c0_30, %c33], %24 {strides = array<i32>} : memref<8x48xf32, #tpu.memory_space<vmem>>, vector<8x3xf32>,
    %c0_31 = arith.constant 0 : index
    %c11 = arith.constant 11 : index
    %26 = vector.load %arg1[%c0_31, %c11] : memref<8x16xf32, #tpu.memory_space<vmem>>, vector<8x3xf32>
    %c0_32 = arith.constant 0 : index
    %c36 = arith.constant 36 : index
    %27 = vector.load %arg2[%c0_32, %c36] : memref<8x48xf32, #tpu.memory_space<vmem>>, vector<8x3xf32>
    tpu.vector_store %arg2[%c0_32, %c36], %26 {strides = array<i32>} : memref<8x48xf32, #tpu.memory_space<vmem>>, vector<8x3xf32>,
    %c0_33 = arith.constant 0 : index
    %c12_34 = arith.constant 12 : index
    %28 = vector.load %arg1[%c0_33, %c12_34] : memref<8x16xf32, #tpu.memory_space<vmem>>, vector<8x3xf32>
    %c0_35 = arith.constant 0 : index
    %c39 = arith.constant 39 : index
    %29 = vector.load %arg2[%c0_35, %c39] : memref<8x48xf32, #tpu.memory_space<vmem>>, vector<8x3xf32>
    tpu.vector_store %arg2[%c0_35, %c39], %28 {strides = array<i32>} : memref<8x48xf32, #tpu.memory_space<vmem>>, vector<8x3xf32>,
    %c0_36 = arith.constant 0 : index
    %c13 = arith.constant 13 : index
    %30 = vector.load %arg1[%c0_36, %c13] : memref<8x16xf32, #tpu.memory_space<vmem>>, vector<8x3xf32>
    %c0_37 = arith.constant 0 : index
    %c42 = arith.constant 42 : index
    %31 = vector.load %arg2[%c0_37, %c42] : memref<8x48xf32, #tpu.memory_space<vmem>>, vector<8x3xf32>
    tpu.vector_store %arg2[%c0_37, %c42], %30 {strides = array<i32>} : memref<8x48xf32, #tpu.memory_space<vmem>>, vector<8x3xf32>,
    %c0_38 = arith.constant 0 : index
    %c14 = arith.constant 14 : index
    %32 = vector.load %arg1[%c0_38, %c14] : memref<8x16xf32, #tpu.memory_space<vmem>>, vector<8x2xf32>
    %c0_39 = arith.constant 0 : index
    %c45 = arith.constant 45 : index
    %33 = vector.load %arg2[%c0_39, %c45] : memref<8x48xf32, #tpu.memory_space<vmem>>, vector<8x2xf32>
    tpu.vector_store %arg2[%c0_39, %c45], %32 {strides = array<i32>} : memref<8x48xf32, #tpu.memory_space<vmem>>, vector<8x2xf32>,
    %cst_40 = arith.constant 0.000000e+00 : f32
    %34 = vector.broadcast %cst_40 : f32 to vector<8x1xf32>
    %c0_41 = arith.constant 0 : index
    %c47 = arith.constant 47 : index
    %35 = vector.load %arg2[%c0_41, %c47] : memref<8x48xf32, #tpu.memory_space<vmem>>, vector<8x1xf32>
    tpu.vector_store %arg2[%c0_41, %c47], %34 {strides = array<i32>} : memref<8x48xf32, #tpu.memory_space<vmem>>, vector<8x1xf32>,
    return
  }
  func.func @transform_0(%arg0: i32) -> (i32, i32) {
    %c0_i32 = arith.constant 0 : i32
    %c0_i32_0 = arith.constant 0 : i32
    return %arg0, %c0_i32 : i32, i32
  }
  func.func @transform_1(%arg0: i32) -> (i32, i32) {
    %c0_i32 = arith.constant 0 : i32
    %c0_i32_0 = arith.constant 0 : i32
    return %arg0, %c0_i32 : i32, i32
  }
}

</mosaic_0001>

<llo_original>
// kernel: tpu_custom_call.1
$region0: #{tpu_custom_call.1}
  #allocation0 [shape = 'u32[]', space=smem, size = 0x4, offset = 0x4, fixed_abs, tag = 'smem constant byte address 0x4 - core index']
  #allocation1 [shape = 'u32[144,128]{1,0:T(1,128)}', space=vmem, size = 0x12000, scoped, tag = 'internal scratch']
  %s0 = inlined_call_operand.hbm [shape: f32[8,16], index: 0, kind: input, shape index: {}]
  %s1 = inlined_call_operand.hbm [shape: f32[8,48], index: 1, kind: output, shape index: {}]
  %s2 = sld [smem:[#allocation0]]
  $region18: #{tpu_custom_call.1} parent=0
    _
  %s4 = ssub.s32 1, %s2
  %s5 = scalar_select 0, %s4, %s2
  $region1: #{tpu_custom_call.1} parent=0
    #allocation2 [shape = 'u8[4096]{0}', space=vmem, size = 0x1000, scoped, tag = 'input window, operand 0, single buffered']
    #allocation3 [shape = 's32[1]{0}', space=sflag, size = 0x4, scoped, tag = 'scoped memory for tpu_custom_call.1']
    #allocation4 [shape = 's32[1]{0}', space=sflag, size = 0x4, scoped, tag = 'scoped memory for tpu_custom_call.1']
    #allocation5 [shape = 'u8[4096]{0}', space=vmem, size = 0x1000, scoped, tag = 'output window, operand 0, single buffered']
    %6 = vsyncpa [#allocation3], 0
    %7 = vsyncpa [#allocation4], 0
    // Predicated region
    $region2: #{tpu_custom_call.1} parent=1 // pred_check
      _
    $region3: #{tpu_custom_call.1} parent=1 // pred_check_branch
      %9 = sbr.rel (0) target = $region5
    $region4: #{tpu_custom_call.1} parent=1 // pred_region
      %s11 = ssub.s32 128, 128
      %12 = vsyncadd [#allocation3], %s11
      %s14 = sshll.u32 [#allocation2], 4
      %s15 = int_to_ptr.vmem [resolvable:$true] %s14
      %17 = dma.hbm_to_vmem [thread:$0]  %s0, 128, %s15, [#allocation3]
    $region5: #{tpu_custom_call.1} parent=1 // pred_fallthru
      _
    // Predicated region
    $region6: #{tpu_custom_call.1} parent=1 // pred_check
      _
    $region7: #{tpu_custom_call.1} parent=1 // pred_check_branch
      %19 = sbr.rel (0) target = $region9
    $region8: #{tpu_custom_call.1} parent=1 // pred_region
      %20 = dma.done [#allocation3], 128
    $region9: #{tpu_custom_call.1} parent=1 // pred_fallthru
      _
    %vm21 = vcmask 7168
    %22 = vst.msk [vmem:[#allocation5] sm:$0xff] %vm21, 0.0
    %v23 = vld [vmem:[#allocation2] sm:$0xff]
    %25 = vrot.lane.b32.xlu0 %v23, 1
    %v26 = vpop.permute.xlu0 %25
    %vm28 = vcmask 23560
    %29 = vst.msk [vmem:[#allocation5] sm:$0xff] %vm28, %v26
    %v30 = vld [vmem:[#allocation2] sm:$0xff]
    %32 = vrot.lane.b32.xlu0 %v30, 3
    %v33 = vpop.permute.xlu0 %32
    %vm35 = vcmask 48152
    %36 = vst.msk [vmem:[#allocation5] sm:$0xff] %vm35, %v33
    %v37 = vld [vmem:[#allocation2] sm:$0xff]
    %39 = vrot.lane.b32.xlu0 %v37, 5
    %v40 = vpop.permute.xlu0 %39
    %vm42 = vcmask 72752
    %43 = vst.msk [vmem:[#allocation5] sm:$0xff] %vm42, %v40
    %v44 = vld [vmem:[#allocation2] sm:$0xff]
    %46 = vrot.lane.b32.xlu0 %v44, 7
    %v47 = vpop.permute.xlu0 %46
    %vm49 = vcmask 97352
    %50 = vst.msk [vmem:[#allocation5] sm:$0xff] %vm49, %v47
    %v51 = vld [vmem:[#allocation2] sm:$0xff]
    %53 = vrot.lane.b32.xlu0 %v51, 9
    %v54 = vpop.permute.xlu0 %53
    %vm56 = vcmask 121952
    %57 = vst.msk [vmem:[#allocation5] sm:$0xff] %vm56, %v54
    %v58 = vld [vmem:[#allocation2] sm:$0xff]
    %60 = vrot.lane.b32.xlu0 %v58, 11
    %v61 = vpop.permute.xlu0 %60
    %vm63 = vcmask 146552
    %64 = vst.msk [vmem:[#allocation5] sm:$0xff] %vm63, %v61
    %v65 = vld [vmem:[#allocation2] sm:$0xff]
    %67 = vrot.lane.b32.xlu0 %v65, 13
    %v68 = vpop.permute.xlu0 %67
    %vm70 = vcmask 171152
    %71 = vst.msk [vmem:[#allocation5] sm:$0xff] %vm70, %v68
    %v72 = vld [vmem:[#allocation2] sm:$0xff]
    %74 = vrot.lane.b32.xlu0 %v72, 15
    %v75 = vpop.permute.xlu0 %74
    %vm77 = vcmask 195752
    %78 = vst.msk [vmem:[#allocation5] sm:$0xff] %vm77, %v75
    %v79 = vld [vmem:[#allocation2] sm:$0xff]
    %81 = vrot.lane.b32.xlu0 %v79, 17
    %v82 = vpop.permute.xlu0 %81
    %vm84 = vcmask 220352
    %85 = vst.msk [vmem:[#allocation5] sm:$0xff] %vm84, %v82
    %v86 = vld [vmem:[#allocation2] sm:$0xff]
    %88 = vrot.lane.b32.xlu0 %v86, 19
    %v89 = vpop.permute.xlu0 %88
    %vm91 = vcmask 244952
    %92 = vst.msk [vmem:[#allocation5] sm:$0xff] %vm91, %v89
    %v93 = vld [vmem:[#allocation2] sm:$0xff]
    %95 = vrot.lane.b32.xlu0 %v93, 21
    %v96 = vpop.permute.xlu0 %95
    %vm98 = vcmask 269552
    %99 = vst.msk [vmem:[#allocation5] sm:$0xff] %vm98, %v96
    %v100 = vld [vmem:[#allocation2] sm:$0xff]
    %102 = vrot.lane.b32.xlu0 %v100, 23
    %v103 = vpop.permute.xlu0 %102
    %vm105 = vcmask 294152
    %106 = vst.msk [vmem:[#allocation5] sm:$0xff] %vm105, %v103
    %v107 = vld [vmem:[#allocation2] sm:$0xff]
    %109 = vrot.lane.b32.xlu0 %v107, 25
    %v110 = vpop.permute.xlu0 %109
    %vm112 = vcmask 318752
    %113 = vst.msk [vmem:[#allocation5] sm:$0xff] %vm112, %v110
    %v114 = vld [vmem:[#allocation2] sm:$0xff]
    %116 = vrot.lane.b32.xlu0 %v114, 27
    %v117 = vpop.permute.xlu0 %116
    %vm119 = vcmask 343352
    %120 = vst.msk [vmem:[#allocation5] sm:$0xff] %vm119, %v117
    %v121 = vld [vmem:[#allocation2] sm:$0xff]
    %123 = vrot.lane.b32.xlu0 %v121, 29
    %v124 = vpop.permute.xlu0 %123
    %vm126 = vcmask 367952
    %127 = vst.msk [vmem:[#allocation5] sm:$0xff] %vm126, %v124
    %v128 = vld [vmem:[#allocation2] sm:$0xff]
    %130 = vrot.lane.b32.xlu0 %v128, 31
    %v131 = vpop.permute.xlu0 %130
    %vm133 = vcmask 384360
    %134 = vst.msk [vmem:[#allocation5] sm:$0xff] %vm133, %v131
    %vm135 = vcmask 392568
    %136 = vst.msk [vmem:[#allocation5] sm:$0xff] %vm135, 0.0
    // Predicated region
    $region10: #{tpu_custom_call.1} parent=1 // pred_check
      _
    $region11: #{tpu_custom_call.1} parent=1 // pred_check_branch
      %138 = sbr.rel (0) target = $region13
    $region12: #{tpu_custom_call.1} parent=1 // pred_region
      %s140 = ssub.s32 128, 128
      %141 = vsyncadd [#allocation4], %s140
      %s143 = sshll.u32 [#allocation5], 4
      %s144 = int_to_ptr.vmem [resolvable:$true] %s143
      %146 = dma.vmem_to_hbm [thread:$0]  %s144, 128, %s1, [#allocation4]
    $region13: #{tpu_custom_call.1} parent=1 // pred_fallthru
      _
    // Predicated region
    $region14: #{tpu_custom_call.1} parent=1 // pred_check
      _
    $region15: #{tpu_custom_call.1} parent=1 // pred_check_branch
      %148 = sbr.rel (0) target = $region17
    $region16: #{tpu_custom_call.1} parent=1 // pred_region
      %149 = dma.done [#allocation4], 128
    $region17: #{tpu_custom_call.1} parent=1 // pred_fallthru
      _
    %150 = vsyncpa [#allocation3], 1
    %151 = vsyncpa [#allocation4], 1

</llo_original>
